<compile_context>
chip_gen: v7x
topology: tpu7x:2x2x1
jax: 0.10.0
libtpu: 0.0.40
codegen_flags: <defaults>
</compile_context>

<pallas_src>
import functools

import jax
import jax.numpy as jnp
from jax import lax
from jax.experimental import pallas as pl
from jax.experimental.pallas import tpu as pltpu


def _subpixel_conv_kernel(x_ref, w_ref, b_ref, a_ref, o_ref, xpad_ref, *,
                          kernel_size, tile_h, pad):
    """One (batch element, H-tile) grid step.

    x_ref   : (1, H, W, Cin)          unpadded NHWC image (resident across H-tiles)
    w_ref   : (Cout, K*K*Cin)         conv weight, im2col layout
    b_ref   : (Cout, 1)               conv bias (broadcast over lanes)
    a_ref   : (1,)                    PReLU alpha (SMEM scalar)
    o_ref   : (1, Cout, tile_h*W)     conv+bias+PReLU output tile (channel-major)
    xpad_ref: (tile_h+2p, W+2p, Cin)  VMEM scratch: zero-padded window for this tile
    """
    K = kernel_size
    TH = tile_h
    _, _, W, Cin = x_ref.shape

    i = pl.program_id(1)
    n_h = pl.num_programs(1)
    row0 = pl.multiple_of(i * TH, TH)

    # ---- fused zero padding: build the padded row window in VMEM ------------
    xpad_ref[...] = jnp.zeros_like(xpad_ref)
    xpad_ref[pad:pad + TH, pad:pad + W, :] = x_ref[0, pl.ds(row0, TH), :, :]
    if pad:
        @pl.when(i > 0)
        def _top_halo():
            xpad_ref[0:pad, pad:pad + W, :] = (
                x_ref[0, pl.ds(row0 - pad, pad), :, :])

        @pl.when(i < n_h - 1)
        def _bottom_halo():
            xpad_ref[pad + TH:2 * pad + TH, pad:pad + W, :] = (
                x_ref[0, pl.ds(row0 + TH, pad), :, :])

    # ---- im2col: fold the K*K taps into the MXU contraction dimension -------
    taps = []
    for ki in range(K):
        for kj in range(K):
            t = xpad_ref[ki:ki + TH, kj:kj + W, :]        # (TH, W, Cin)
            taps.append(t.reshape(TH * W, Cin))
    patch = jnp.concatenate(taps, axis=1)                 # (TH*W, K*K*Cin)

    # Single MXU matmul (contract over K*K*Cin); result is channel-major so the
    # output store is lane-dense (last dim = TH*W, multiple of 128).
    acc = lax.dot_general(
        w_ref[...], patch,
        dimension_numbers=(((1,), (1,)), ((), ())),
        preferred_element_type=jnp.float32)               # (Cout, TH*W)

    acc = acc + b_ref[...]                                # bias (lane broadcast)
    alpha = a_ref[0]
    y = jnp.where(acc >= 0.0, acc, alpha * acc)           # PReLU (shared alpha)
    o_ref[0] = y.astype(o_ref.dtype)


def _pick_tile_h(H, W, cout, budget_bytes=2 << 20):
    """Largest divisor of H whose output tile is lane-dense and fits the budget."""
    for th in range(H, 0, -1):
        if H % th:
            continue
        lane_ok = (th * W) % 128 == 0 or th == H
        if lane_ok and th * W * cout * 4 <= budget_bytes:
            return th
    return H


def subpixel_conv_block(x_nchw, weight, bias, prelu_alpha, *, kernel_size=3,
                        scaling_factor=2, tile_h=None):
    """Forward pass equivalent to SubPixelConvolutionalBlock.forward.

    x_nchw      : (N, C, H, W) float32
    weight      : (C*s^2, C, K, K)   PyTorch Conv2d weight layout
    bias        : (C*s^2,)
    prelu_alpha : scalar
    returns     : (N, C, H*s, W*s) float32
    """
    N, C, H, W = x_nchw.shape
    K = kernel_size
    s = scaling_factor
    Cout = C * s * s
    pad = K // 2
    assert weight.shape == (Cout, C, K, K), weight.shape

    if tile_h is None:
        tile_h = _pick_tile_h(H, W, Cout)
    assert H % tile_h == 0, (H, tile_h)
    assert (tile_h * W) % 128 == 0 or tile_h == H, (tile_h, W)
    TH = tile_h

    # Cheap one-shot layout prep: NCHW -> NHWC activations, im2col weights.
    x_nhwc = jnp.transpose(x_nchw, (0, 2, 3, 1)).astype(jnp.float32)   # (N,H,W,C)
    w2d = jnp.transpose(weight, (0, 2, 3, 1)).reshape(Cout, K * K * C)
    w2d = w2d.astype(jnp.float32)                                      # (Cout, K*K*Cin)
    b2d = bias.reshape(Cout, 1).astype(jnp.float32)
    a1 = jnp.asarray(prelu_alpha, jnp.float32).reshape(1)

    kernel = functools.partial(_subpixel_conv_kernel,
                               kernel_size=K, tile_h=TH, pad=pad)

    conv_flat = pl.pallas_call(
        kernel,
        out_shape=jax.ShapeDtypeStruct((N, Cout, H * W), jnp.float32),
        grid_spec=pltpu.PrefetchScalarGridSpec(
            num_scalar_prefetch=0,
            grid=(N, H // TH),
            in_specs=[
                pl.BlockSpec((1, H, W, C), lambda n, i: (n, 0, 0, 0)),
                pl.BlockSpec((Cout, K * K * C), lambda n, i: (0, 0)),
                pl.BlockSpec((Cout, 1), lambda n, i: (0, 0)),
                pl.BlockSpec(memory_space=pltpu.MemorySpace.SMEM),   # alpha
            ],
            out_specs=pl.BlockSpec((1, Cout, TH * W), lambda n, i: (n, 0, i)),
            scratch_shapes=[
                pltpu.VMEM((TH + 2 * pad, W + 2 * pad, C), jnp.float32),
            ],
        ),
        compiler_params=pltpu.CompilerParams(
            dimension_semantics=("parallel", "parallel")),
    )(x_nhwc, w2d, b2d, a1)

    # PixelShuffle: kernel output is already channel-major (NCHW conv output),
    # so this is exactly the PyTorch rearrangement (pure data movement in XLA).
    conv = conv_flat.reshape(N, Cout, H, W)
    y = conv.reshape(N, C, s, s, H, W)
    y = jnp.transpose(y, (0, 1, 4, 2, 5, 3))
    y = y.reshape(N, C, H * s, W * s)
    return y


def _reference(x_nchw, weight, bias, prelu_alpha, *, kernel_size=3, scaling_factor=2):
    """Pure-JAX reference mirroring the PyTorch module."""
    N, C, H, W = x_nchw.shape
    s = scaling_factor
    conv = lax.conv_general_dilated(
        x_nchw, weight, window_strides=(1, 1),
        padding=[(kernel_size // 2, kernel_size // 2)] * 2,
        dimension_numbers=("NCHW", "OIHW", "NCHW"))
    conv = conv + bias.reshape(1, -1, 1, 1)
    y = conv.reshape(N, C, s, s, H, W)
    y = jnp.transpose(y, (0, 1, 4, 2, 5, 3))
    y = y.reshape(N, C, H * s, W * s)
    return jnp.where(y > 0, y, prelu_alpha * y)


if __name__ == "__main__":
    # Small shapes consistent with the module's forward: (N, n_channels, H, W).
    N, C, H, W = 2, 4, 16, 16
    K, S = 3, 2
    Cout = C * S * S

    key = jax.random.PRNGKey(0)
    kx, kw, kb = jax.random.split(key, 3)

    x = jax.random.normal(kx, (N, C, H, W), dtype=jnp.float32)
    weight = jax.random.normal(kw, (Cout, C, K, K), dtype=jnp.float32) * 0.1
    bias = jax.random.normal(kb, (Cout,), dtype=jnp.float32) * 0.1
    prelu_alpha = jnp.float32(0.25)   # PyTorch PReLU default init

    # tile_h=8 -> grid (2, 2): exercises the multi-tile path and halo copies.
    out = subpixel_conv_block(x, weight, bias, prelu_alpha,
                              kernel_size=K, scaling_factor=S, tile_h=8)
    out = jax.block_until_ready(out)

    ref = _reference(x, weight, bias, prelu_alpha, kernel_size=K, scaling_factor=S)
    assert out.shape == (N, C, H * S, W * S), out.shape
    assert jnp.allclose(out, ref, atol=1e-3, rtol=1e-3), (
        float(jnp.max(jnp.abs(out - ref))))

    print("KERNEL_OK")
</pallas_src>

<mosaic_0001>
module attributes {stable_mosaic.version = 11 : i64} {
  func.func @_subpixel_conv_kernel(%arg0: i32, %arg1: i32, %arg2: memref<1x16x16x4xf32, #tpu.memory_space<vmem>>, %arg3: memref<16x36xf32, #tpu.memory_space<vmem>>, %arg4: memref<16x1xf32, #tpu.memory_space<vmem>>, %arg5: memref<1xf32, #tpu.memory_space<smem>>, %arg6: memref<1x16x128xf32, #tpu.memory_space<vmem>>, %arg7: memref<10x18x4xf32, #tpu.memory_space<vmem>>) attributes {dimension_semantics = [#tpu.dimension_semantics<parallel>, #tpu.dimension_semantics<parallel>], iteration_bounds = array<i64: 2, 2>, scalar_prefetch = 0 : i64, scratch_operands = 1 : i64, tpu.core_type = #tpu.core_type<tc>, window_params = [{transform_indices = @transform_0, window_bounds = array<i64: 1, 16, 16, 4>}, {pipeline_mode = #tpu.pipeline_mode<synchronous>, transform_indices = @transform_1, window_bounds = array<i64: 16, 36>}, {pipeline_mode = #tpu.pipeline_mode<synchronous>, transform_indices = @transform_2, window_bounds = array<i64: 16, 1>}, {transform_indices = @transform_3, window_bounds = array<i64: 1>}, {transform_indices = @transform_4, window_bounds = array<i64: 1, 16, 128>}]} {
    %c8_i32 = arith.constant 8 : i32
    %0 = arith.muli %arg1, %c8_i32 : i32
    %1 = tpu.assume_multiple %0, 8 : i32
    %cst = arith.constant 0.000000e+00 : f32
    %2 = vector.broadcast %cst : f32 to vector<10x18x4xf32>
    %c0 = arith.constant 0 : index
    %c0_0 = arith.constant 0 : index
    %c0_1 = arith.constant 0 : index
    %3 = vector.load %arg7[%c0, %c0_0, %c0_1] : memref<10x18x4xf32, #tpu.memory_space<vmem>>, vector<10x18x4xf32>
    tpu.vector_store %arg7[%c0, %c0_0, %c0_1], %2 {strides = array<i32>} : memref<10x18x4xf32, #tpu.memory_space<vmem>>, vector<10x18x4xf32>,
    %c0_2 = arith.constant 0 : index
    %4 = arith.index_cast %1 : i32 to index
    %c0_3 = arith.constant 0 : index
    %c0_4 = arith.constant 0 : index
    %5 = vector.load %arg2[%c0_2, %4, %c0_3, %c0_4] : memref<1x16x16x4xf32, #tpu.memory_space<vmem>>, vector<1x8x16x4xf32>
    %6 = vector.shape_cast %5 : vector<1x8x16x4xf32> to vector<8x16x4xf32>
    %c1 = arith.constant 1 : index
    %c1_5 = arith.constant 1 : index
    %c0_6 = arith.constant 0 : index
    %7 = vector.load %arg7[%c1, %c1_5, %c0_6] : memref<10x18x4xf32, #tpu.memory_space<vmem>>, vector<8x16x4xf32>
    tpu.vector_store %arg7[%c1, %c1_5, %c0_6], %6 {strides = array<i32>} : memref<10x18x4xf32, #tpu.memory_space<vmem>>, vector<8x16x4xf32>,
    %c0_i32 = arith.constant 0 : i32
    %8 = arith.cmpi sgt, %arg1, %c0_i32 : i32
    %9 = arith.extui %8 : i1 to i32
    %c0_i32_7 = arith.constant 0 : i32
    %10 = arith.cmpi ne, %9, %c0_i32_7 : i32
    scf.if %10 {
      %c1_i32_45 = arith.constant 1 : i32
      %47 = arith.subi %1, %c1_i32_45 : i32
      %c0_46 = arith.constant 0 : index
      %48 = arith.index_cast %47 : i32 to index
      %c0_47 = arith.constant 0 : index
      %c0_48 = arith.constant 0 : index
      %49 = vector.load %arg2[%c0_46, %48, %c0_47, %c0_48] : memref<1x16x16x4xf32, #tpu.memory_space<vmem>>, vector<1x1x16x4xf32>
      %50 = vector.shape_cast %49 : vector<1x1x16x4xf32> to vector<1x16x4xf32>
      %c0_49 = arith.constant 0 : index
      %c1_50 = arith.constant 1 : index
      %c0_51 = arith.constant 0 : index
      %51 = vector.load %arg7[%c0_49, %c1_50, %c0_51] : memref<10x18x4xf32, #tpu.memory_space<vmem>>, vector<1x16x4xf32>
      tpu.vector_store %arg7[%c0_49, %c1_50, %c0_51], %50 {strides = array<i32>} : memref<10x18x4xf32, #tpu.memory_space<vmem>>, vector<1x16x4xf32>,
    } else {
    }
    %c1_i32 = arith.constant 1 : i32
    %11 = arith.cmpi slt, %arg1, %c1_i32 : i32
    %12 = arith.extui %11 : i1 to i32
    %c0_i32_8 = arith.constant 0 : i32
    %13 = arith.cmpi ne, %12, %c0_i32_8 : i32
    scf.if %13 {
      %c8_i32_45 = arith.constant 8 : i32
      %47 = arith.addi %1, %c8_i32_45 : i32
      %c0_46 = arith.constant 0 : index
      %48 = arith.index_cast %47 : i32 to index
      %c0_47 = arith.constant 0 : index
      %c0_48 = arith.constant 0 : index
      %49 = vector.load %arg2[%c0_46, %48, %c0_47, %c0_48] : memref<1x16x16x4xf32, #tpu.memory_space<vmem>>, vector<1x1x16x4xf32>
      %50 = vector.shape_cast %49 : vector<1x1x16x4xf32> to vector<1x16x4xf32>
      %c9 = arith.constant 9 : index
      %c1_49 = arith.constant 1 : index
      %c0_50 = arith.constant 0 : index
      %51 = vector.load %arg7[%c9, %c1_49, %c0_50] : memref<10x18x4xf32, #tpu.memory_space<vmem>>, vector<1x16x4xf32>
      tpu.vector_store %arg7[%c9, %c1_49, %c0_50], %50 {strides = array<i32>} : memref<10x18x4xf32, #tpu.memory_space<vmem>>, vector<1x16x4xf32>,
    } else {
    }
    %c0_9 = arith.constant 0 : index
    %c0_10 = arith.constant 0 : index
    %c0_11 = arith.constant 0 : index
    %14 = vector.load %arg7[%c0_9, %c0_10, %c0_11] : memref<10x18x4xf32, #tpu.memory_space<vmem>>, vector<8x16x4xf32>
    %15 = vector.shape_cast %14 : vector<8x16x4xf32> to vector<128x4xf32>
    %c0_12 = arith.constant 0 : index
    %c1_13 = arith.constant 1 : index
    %c0_14 = arith.constant 0 : index
    %16 = vector.load %arg7[%c0_12, %c1_13, %c0_14] : memref<10x18x4xf32, #tpu.memory_space<vmem>>, vector<8x16x4xf32>
    %17 = vector.shape_cast %16 : vector<8x16x4xf32> to vector<128x4xf32>
    %c0_15 = arith.constant 0 : index
    %c2 = arith.constant 2 : index
    %c0_16 = arith.constant 0 : index
    %18 = vector.load %arg7[%c0_15, %c2, %c0_16] : memref<10x18x4xf32, #tpu.memory_space<vmem>>, vector<8x16x4xf32>
    %19 = vector.shape_cast %18 : vector<8x16x4xf32> to vector<128x4xf32>
    %c1_17 = arith.constant 1 : index
    %c0_18 = arith.constant 0 : index
    %c0_19 = arith.constant 0 : index
    %20 = vector.load %arg7[%c1_17, %c0_18, %c0_19] : memref<10x18x4xf32, #tpu.memory_space<vmem>>, vector<8x16x4xf32>
    %21 = vector.shape_cast %20 : vector<8x16x4xf32> to vector<128x4xf32>
    %c1_20 = arith.constant 1 : index
    %c1_21 = arith.constant 1 : index
    %c0_22 = arith.constant 0 : index
    %22 = vector.load %arg7[%c1_20, %c1_21, %c0_22] : memref<10x18x4xf32, #tpu.memory_space<vmem>>, vector<8x16x4xf32>
    %23 = vector.shape_cast %22 : vector<8x16x4xf32> to vector<128x4xf32>
    %c1_23 = arith.constant 1 : index
    %c2_24 = arith.constant 2 : index
    %c0_25 = arith.constant 0 : index
    %24 = vector.load %arg7[%c1_23, %c2_24, %c0_25] : memref<10x18x4xf32, #tpu.memory_space<vmem>>, vector<8x16x4xf32>
    %25 = vector.shape_cast %24 : vector<8x16x4xf32> to vector<128x4xf32>
    %c2_26 = arith.constant 2 : index
    %c0_27 = arith.constant 0 : index
    %c0_28 = arith.constant 0 : index
    %26 = vector.load %arg7[%c2_26, %c0_27, %c0_28] : memref<10x18x4xf32, #tpu.memory_space<vmem>>, vector<8x16x4xf32>
    %27 = vector.shape_cast %26 : vector<8x16x4xf32> to vector<128x4xf32>
    %c2_29 = arith.constant 2 : index
    %c1_30 = arith.constant 1 : index
    %c0_31 = arith.constant 0 : index
    %28 = vector.load %arg7[%c2_29, %c1_30, %c0_31] : memref<10x18x4xf32, #tpu.memory_space<vmem>>, vector<8x16x4xf32>
    %29 = vector.shape_cast %28 : vector<8x16x4xf32> to vector<128x4xf32>
    %c2_32 = arith.constant 2 : index
    %c2_33 = arith.constant 2 : index
    %c0_34 = arith.constant 0 : index
    %30 = vector.load %arg7[%c2_32, %c2_33, %c0_34] : memref<10x18x4xf32, #tpu.memory_space<vmem>>, vector<8x16x4xf32>
    %31 = vector.shape_cast %30 : vector<8x16x4xf32> to vector<128x4xf32>
    %32 = tpu.concatenate %15, %17, %19, %21, %23, %25, %27, %29, %31 in 1 : vector<128x4xf32>, vector<128x4xf32>, vector<128x4xf32>, vector<128x4xf32>, vector<128x4xf32>, vector<128x4xf32>, vector<128x4xf32>, vector<128x4xf32>, vector<128x4xf32> -> vector<128x36xf32>
    %c0_35 = arith.constant 0 : index
    %c0_36 = arith.constant 0 : index
    %33 = vector.load %arg3[%c0_35, %c0_36] : memref<16x36xf32, #tpu.memory_space<vmem>>, vector<16x36xf32>
    %cst_37 = arith.constant dense<0.000000e+00> : vector<16x128xf32>
    %34 = tpu.matmul %33, %32, %cst_37 {dimension_numbers = #tpu.dot_dimension_numbers<[1], [1], [0], [0], [0, 0, 1, 0], [], []>} : vector<16x36xf32>, vector<128x36xf32>, vector<16x128xf32> -> vector<16x128xf32>
    %c0_38 = arith.constant 0 : index
    %c0_39 = arith.constant 0 : index
    %35 = vector.load %arg4[%c0_38, %c0_39] : memref<16x1xf32, #tpu.memory_space<vmem>>, vector<16x1xf32>
    %36 = vector.broadcast %35 : vector<16x1xf32> to vector<16x128xf32>
    %37 = arith.addf %34, %36 : vector<16x128xf32>
    %c0_40 = arith.constant 0 : index
    %38 = memref.load %arg5[%c0_40] : memref<1xf32, #tpu.memory_space<smem>>
    %cst_41 = arith.constant 0.000000e+00 : f32
    %39 = vector.broadcast %cst_41 : f32 to vector<16x128xf32>
    %40 = arith.cmpf oge, %37, %39 : vector<16x128xf32>
    %41 = vector.broadcast %38 : f32 to vector<16x128xf32>
    %42 = arith.mulf %41, %37 : vector<16x128xf32>
    %43 = arith.select %40, %37, %42 : vector<16x128xi1>, vector<16x128xf32>
    %c0_42 = arith.constant 0 : index
    %c0_43 = arith.constant 0 : index
    %c0_44 = arith.constant 0 : index
    %44 = vector.load %arg6[%c0_42, %c0_43, %c0_44] : memref<1x16x128xf32, #tpu.memory_space<vmem>>, vector<1x16x128xf32>
    %45 = vector.shape_cast %44 : vector<1x16x128xf32> to vector<16x128xf32>
    %46 = vector.shape_cast %43 : vector<16x128xf32> to vector<1x16x128xf32>
    tpu.vector_store %arg6[%c0_42, %c0_43, %c0_44], %46 {strides = array<i32>} : memref<1x16x128xf32, #tpu.memory_space<vmem>>, vector<1x16x128xf32>,
    return
  }
  func.func @transform_0(%arg0: i32, %arg1: i32) -> (i32, i32, i32, i32) {
    %c0_i32 = arith.constant 0 : i32
    %c0_i32_0 = arith.constant 0 : i32
    %c0_i32_1 = arith.constant 0 : i32
    %c0_i32_2 = arith.constant 0 : i32
    return %arg0, %c0_i32, %c0_i32_0, %c0_i32_1 : i32, i32, i32, i32
  }
  func.func @transform_1(%arg0: i32, %arg1: i32) -> (i32, i32) {
    %c0_i32 = arith.constant 0 : i32
    %c0_i32_0 = arith.constant 0 : i32
    %c0_i32_1 = arith.constant 0 : i32
    return %c0_i32, %c0_i32_0 : i32, i32
  }
  func.func @transform_2(%arg0: i32, %arg1: i32) -> (i32, i32) {
    %c0_i32 = arith.constant 0 : i32
    %c0_i32_0 = arith.constant 0 : i32
    %c0_i32_1 = arith.constant 0 : i32
    return %c0_i32, %c0_i32_0 : i32, i32
  }
  func.func @transform_3(%arg0: i32, %arg1: i32) -> i32 {
    %c0_i32 = arith.constant 0 : i32
    %c0_i32_0 = arith.constant 0 : i32
    return %c0_i32 : i32
  }
  func.func @transform_4(%arg0: i32, %arg1: i32) -> (i32, i32, i32) {
    %c0_i32 = arith.constant 0 : i32
    %c0_i32_0 = arith.constant 0 : i32
    return %arg0, %c0_i32, %arg1 : i32, i32, i32
  }
}

</mosaic_0001>

<llo_original>
// kernel: tpu_custom_call.1
$region0: #{tpu_custom_call.1}
  #allocation0 [shape = 'u32[]', space=smem, size = 0x4, offset = 0x4, fixed_abs, tag = 'smem constant byte address 0x4 - core index']
  #allocation1 [shape = 'u32[144,128]{1,0:T(1,128)}', space=vmem, size = 0x12000, scoped, tag = 'internal scratch']
  #allocation2 [shape = 'f32[10,18,4]{2,1,0:T(8,128)}', space=vmem, size = 0x1e000, scoped, tag = 'scratch operand']
  #allocation3 [shape = 'f32[1]{0:T(128)S(6)}', space=smem, size = 0x200, scoped, tag = 'scoped memory for tpu_custom_call.1']
  %s0 = inlined_call_operand.vmem [shape: f32[2,16,16,4], index: 0, kind: input, shape index: {}]
  %s1 = inlined_call_operand.vmem [shape: f32[16,36], index: 1, kind: input, shape index: {}]
  %s2 = inlined_call_operand.vmem [shape: f32[16,1], index: 2, kind: input, shape index: {}]
  %s3 = inlined_call_operand.<no memory space> [shape: f32[1], index: 3, kind: input, shape index: {}]
  %s4 = inlined_call_operand.hbm [shape: f32[2,16,256], index: 4, kind: output, shape index: {}]
  %s5 = sld [smem:[#allocation0]]
  $region57: #{tpu_custom_call.1} parent=0
    _
  %s7 = ssub.s32 1, %s5
  %s8 = scalar_select 0, %s7, %s5
  %9 = sst [smem:[#allocation3]] %s3
  $region1: #{tpu_custom_call.1} parent=0
    #allocation4 [shape = 'u8[16384]{0}', space=vmem, size = 0x4000, scoped, tag = 'output window, operand 0']
    #allocation5 [shape = 's32[2]{0}', space=sflag, size = 0x8, scoped, tag = 'scoped memory for tpu_custom_call.1']
    %10 = vsyncpa [#allocation5], 0
    %s11 = scalar_lea.sflag [#allocation5], 1
    %12 = vsyncpa %s11, 0
    loop: start=0, step=1, limit=6
    $region2: #{tpu_custom_call.1} parent=1 // loop_pre_header
      _
    $region3: #{tpu_custom_call.1} parent=1 // loop_header
      %s14 = sphi 0, %s18
      %p15 = scmp.ge.s32.totalorder %s14, 6
      %s21 = sphi 0, %s33
      %s22 = sphi 0, %s29
      %s23 = sphi 0, %s21
      %s24 = sphi 0, %s22
      %s25 = sphi 0, %s23
      %s26 = sphi 0, %s24
      %s36 = sphi 0, %s38
      %s39 = sphi 0, %s36
      %s40 = sphi 0, %s39
      %s56 = sphi 0, %s40
      %s60 = sphi 0, %s60
      %s62 = sphi 0, %s60
      %s63 = sphi 0, %s62
      %s77 = sphi 0, %s63
      %s81 = sphi 0, %s81
      %s83 = sphi 0, %s81
      %s84 = sphi 0, %s83
      %s98 = sphi 0, %s84
      %s102 = sphi 0, %s102
      %s104 = sphi 0, %s102
      %s105 = sphi 0, %s104
      %s119 = sphi 0, %s105
      %s127 = sphi 0, %s129
      %s130 = sphi 0, %s127
      %s131 = sphi 0, %s130
      %s147 = sphi 0, %s131
    $region4: #{tpu_custom_call.1} parent=1 // loop_header_branch
      %17 = sbr.rel (%p15) target = $region8
    $region5: #{tpu_custom_call.1} parent=1 // loop_body
      %s19 = ssub.s32 %s14, 1
      %s20 = ssub.s32 %s14, 2
      %s27 = sadd.s32 1, %s22
      %p28 = scmp.ge.s32.totalorder %s27, 2
      %s29 = scalar_select %p28, 0, %s27
      %s30 = sadd.s32 1, %s21
      %s31 = scalar_select %p28, %s30, %s21
      %p32 = scmp.ge.s32.totalorder %s31, 2
      %s33 = scalar_select %p32, 0, %s31
      %s34 = ssub.s32 %s21, %s33
      %p35 = scmp.eq.s32.totalorder %s34, 0
      %s37 = sadd.s32 %s36, 1
      %s38 = scalar_select %p35, %s36, %s37
      %p41 = pneg %p35
      %p42 = scmp.eq.s32.totalorder %s14, 3
      %p43 = por %p41, %p42
      %p44 = scmp.ne.s32.totalorder %s36, %s39
      %p45 = scmp.eq.s32.totalorder %s14, 0
      %p46 = por %p44, %p45
      %p47 = scmp.ne.s32.totalorder %s36, %s39
      %p48 = scmp.eq.s32.totalorder %s19, 3
      %p49 = por %p47, %p48
      %p50 = scmp.ne.s32.totalorder %s39, %s40
      %p51 = scmp.eq.s32.totalorder %s19, 0
      %p52 = por %p50, %p51
      %p53 = scmp.ne.s32.totalorder %s39, %s40
      %p54 = scmp.eq.s32.totalorder %s20, 3
      %p55 = por %p53, %p54
      %p57 = scmp.ne.s32.totalorder %s40, %s56
      %p58 = scmp.eq.s32.totalorder %s20, 0
      %p59 = por %p57, %p58
      %s61 = sadd.s32 %s60, 1
      %p64 = scmp.eq.s32.totalorder %s14, 3
      %p65 = scmp.ne.s32.totalorder %s60, %s62
      %p66 = scmp.eq.s32.totalorder %s14, 0
      %p67 = por %p65, %p66
      %p68 = scmp.ne.s32.totalorder %s60, %s62
      %p69 = scmp.eq.s32.totalorder %s19, 3
      %p70 = por %p68, %p69
      %p71 = scmp.ne.s32.totalorder %s62, %s63
      %p72 = scmp.eq.s32.totalorder %s19, 0
      %p73 = por %p71, %p72
      %p74 = scmp.ne.s32.totalorder %s62, %s63
      %p75 = scmp.eq.s32.totalorder %s20, 3
      %p76 = por %p74, %p75
      %p78 = scmp.ne.s32.totalorder %s63, %s77
      %p79 = scmp.eq.s32.totalorder %s20, 0
      %p80 = por %p78, %p79
      %s82 = sadd.s32 %s81, 1
      %p85 = scmp.eq.s32.totalorder %s14, 3
      %p86 = scmp.ne.s32.totalorder %s81, %s83
      %p87 = scmp.eq.s32.totalorder %s14, 0
      %p88 = por %p86, %p87
      %p89 = scmp.ne.s32.totalorder %s81, %s83
      %p90 = scmp.eq.s32.totalorder %s19, 3
      %p91 = por %p89, %p90
      %p92 = scmp.ne.s32.totalorder %s83, %s84
      %p93 = scmp.eq.s32.totalorder %s19, 0
      %p94 = por %p92, %p93
      %p95 = scmp.ne.s32.totalorder %s83, %s84
      %p96 = scmp.eq.s32.totalorder %s20, 3
      %p97 = por %p95, %p96
      %p99 = scmp.ne.s32.totalorder %s84, %s98
      %p100 = scmp.eq.s32.totalorder %s20, 0
      %p101 = por %p99, %p100
      %s103 = sadd.s32 %s102, 1
      %p106 = scmp.eq.s32.totalorder %s14, 3
      %p107 = scmp.ne.s32.totalorder %s102, %s104
      %p108 = scmp.eq.s32.totalorder %s14, 0
      %p109 = por %p107, %p108
      %p110 = scmp.ne.s32.totalorder %s102, %s104
      %p111 = scmp.eq.s32.totalorder %s19, 3
      %p112 = por %p110, %p111
      %p113 = scmp.ne.s32.totalorder %s104, %s105
      %p114 = scmp.eq.s32.totalorder %s19, 0
      %p115 = por %p113, %p114
      %p116 = scmp.ne.s32.totalorder %s104, %s105
      %p117 = scmp.eq.s32.totalorder %s20, 3
      %p118 = por %p116, %p117
      %p120 = scmp.ne.s32.totalorder %s105, %s119
      %p121 = scmp.eq.s32.totalorder %s20, 0
      %p122 = por %p120, %p121
      %s123 = ssub.s32 %s21, %s33
      %s124 = ssub.s32 %s22, %s29
      %s125 = sor.u32 %s123, %s124
      %p126 = scmp.eq.s32.totalorder %s125, 0
      %s128 = sadd.s32 %s127, 1
      %s129 = scalar_select %p126, %s127, %s128
      %p132 = pneg %p126
      %p133 = scmp.eq.s32.totalorder %s14, 3
      %p134 = por %p132, %p133
      %p135 = scmp.ne.s32.totalorder %s127, %s130
      %p136 = scmp.eq.s32.totalorder %s14, 0
      %p137 = por %p135, %p136
      %p138 = scmp.ne.s32.totalorder %s127, %s130
      %p139 = scmp.eq.s32.totalorder %s19, 3
      %p140 = por %p138, %p139
      %p141 = scmp.ne.s32.totalorder %s130, %s131
      %p142 = scmp.eq.s32.totalorder %s19, 0
      %p143 = por %p141, %p142
      %p144 = scmp.ne.s32.totalorder %s130, %s131
      %p145 = scmp.eq.s32.totalorder %s20, 3
      %p146 = por %p144, %p145
      %p148 = scmp.ne.s32.totalorder %s131, %s147
      %p149 = scmp.eq.s32.totalorder %s20, 0
      %p150 = por %p148, %p149
      %p151 = scmp.le.s32.totalorder 1, %s14
      %p152 = scmp.lt.s32.totalorder %s14, 5
      %p153 = pnand %p151, %p152
      %p154 = pneg %p153
      // Predicated region
      $region9: #{tpu_custom_call.1} parent=5 // pred_check
        _
      $region10: #{tpu_custom_call.1} parent=5 // pred_check_branch
        %156 = sbr.rel (%p153) target = $region12
      $region11: #{tpu_custom_call.1} parent=5 // pred_region
        %s157 = ssub.s32 %s14, 1
        // Predicated region
        $region13: #{tpu_custom_call.1} parent=11 // pred_check
          %p158 = pneg %p73
        $region14: #{tpu_custom_call.1} parent=11 // pred_check_branch
          %160 = sbr.rel (%p158) target = $region16
        $region15: #{tpu_custom_call.1} parent=11 // pred_region
          _
        $region16: #{tpu_custom_call.1} parent=11 // pred_fallthru
          _
        // Predicated region
        $region17: #{tpu_custom_call.1} parent=11 // pred_check
          %p161 = pneg %p94
        $region18: #{tpu_custom_call.1} parent=11 // pred_check_branch
          %163 = sbr.rel (%p161) target = $region20
        $region19: #{tpu_custom_call.1} parent=11 // pred_region
          _
        $region20: #{tpu_custom_call.1} parent=11 // pred_fallthru
          _
        // Predicated region
        $region21: #{tpu_custom_call.1} parent=11 // pred_check
          %p164 = pneg %p115
        $region22: #{tpu_custom_call.1} parent=11 // pred_check_branch
          %166 = sbr.rel (%p164) target = $region24
        $region23: #{tpu_custom_call.1} parent=11 // pred_region
          _
        $region24: #{tpu_custom_call.1} parent=11 // pred_fallthru
          _
      $region12: #{tpu_custom_call.1} parent=5 // pred_fallthru
        _
      %p167 = scmp.lt.s32.totalorder %s14, 4
      // Predicated region
      $region25: #{tpu_custom_call.1} parent=5 // pred_check
        %p168 = pneg %p167
      $region26: #{tpu_custom_call.1} parent=5 // pred_check_branch
        %170 = sbr.rel (%p168) target = $region28
      $region27: #{tpu_custom_call.1} parent=5 // pred_region
        // Predicated region
        $region29: #{tpu_custom_call.1} parent=27 // pred_check
          %p171 = pneg %p46
        $region30: #{tpu_custom_call.1} parent=27 // pred_check_branch
          %173 = sbr.rel (%p171) target = $region32
        $region31: #{tpu_custom_call.1} parent=27 // pred_region
          %p174 = scmp.lt.s32.totalorder %s21, 1
          %s175 = scalar_select %p174, %s21, 1
          %s176 = smul.addr %s175, 32
          %s177 = smul.addr %s176, 8
          %s178 = scalar_lea.vmem %s0, %s177
        $region32: #{tpu_custom_call.1} parent=27 // pred_fallthru
          _
      $region28: #{tpu_custom_call.1} parent=5 // pred_fallthru
        _
      %p179 = scmp.le.s32.totalorder 1, %s14
      %p180 = scmp.lt.s32.totalorder %s14, 5
      %p181 = pnand %p179, %p180
      %p182 = pneg %p181
      // Predicated region
      $region33: #{tpu_custom_call.1} parent=5 // pred_check
        _
      $region34: #{tpu_custom_call.1} parent=5 // pred_check_branch
        %184 = sbr.rel (%p181) target = $region36
      $region35: #{tpu_custom_call.1} parent=5 // pred_region
        %s185 = ssub.s32 %s14, 1
        %p186 = scmp.lt.s32.totalorder %s23, 1
        %s187 = scalar_select %p186, %s23, 1
        %s188 = smul.addr %s187, 32
        %s189 = smul.addr %s188, 8
        %s190 = scalar_lea.vmem %s0, %s189
        %p191 = pneg %p52
        %p192 = pneg %p49
        %p193 = pneg %p73
        %p194 = pneg %p70
        %p195 = pneg %p94
        %p196 = pneg %p91
        %p197 = pneg %p115
        %p198 = pneg %p112
        %p199 = pneg %p143
        %p200 = pneg %p140
        %s201 = sand.u32 %s130, 1
        %s202 = scalar_lea.sflag [#allocation5], %s201
        %s203 = sand.u32 %s130, 1
        %s204 = smul.addr %s203, 16
        %s205 = scalar_lea.vmem [#allocation4], %s204
        %p206 = scmp.lt.s32.totalorder %s23, 1
        %s207 = scalar_select %p206, %s23, 1
        %s208 = smul.addr %s207, 32
        %s209 = smul.addr %s208, 8
        %s210 = scalar_lea.vmem %s0, %s209
        %s211 = smul.u32 %s24, 8
        %vm212 = vcmask 31744
        %213 = vst.msk [vmem:[#allocation2] sm:$0xff] %vm212, 0.0
        %214 = vst.msk [vmem:[#allocation2 + $0x8] sm:$0xff] %vm212, 0.0
        %vm215 = vcmask 25600
        %216 = vst.msk [vmem:[#allocation2 + $0x10] sm:$0x3] %vm215, 0.0
        %217 = vst.msk [vmem:[#allocation2 + $0x18] sm:$0xff] %vm212, 0.0
        %218 = vst.msk [vmem:[#allocation2 + $0x20] sm:$0xff] %vm212, 0.0
        %219 = vst.msk [vmem:[#allocation2 + $0x28] sm:$0x3] %vm215, 0.0
        %220 = vst.msk [vmem:[#allocation2 + $0x30] sm:$0xff] %vm212, 0.0
        %221 = vst.msk [vmem:[#allocation2 + $0x38] sm:$0xff] %vm212, 0.0
        %222 = vst.msk [vmem:[#allocation2 + $0x40] sm:$0x3] %vm215, 0.0
        %223 = vst.msk [vmem:[#allocation2 + $0x48] sm:$0xff] %vm212, 0.0
        %224 = vst.msk [vmem:[#allocation2 + $0x50] sm:$0xff] %vm212, 0.0
        %225 = vst.msk [vmem:[#allocation2 + $0x58] sm:$0x3] %vm215, 0.0
        %226 = vst.msk [vmem:[#allocation2 + $0x60] sm:$0xff] %vm212, 0.0
        %227 = vst.msk [vmem:[#allocation2 + $0x68] sm:$0xff] %vm212, 0.0
        %228 = vst.msk [vmem:[#allocation2 + $0x70] sm:$0x3] %vm215, 0.0
        %229 = vst.msk [vmem:[#allocation2 + $0x78] sm:$0xff] %vm212, 0.0
        %230 = vst.msk [vmem:[#allocation2 + $0x80] sm:$0xff] %vm212, 0.0
        %231 = vst.msk [vmem:[#allocation2 + $0x88] sm:$0x3] %vm215, 0.0
        %232 = vst.msk [vmem:[#allocation2 + $0x90] sm:$0xff] %vm212, 0.0
        %233 = vst.msk [vmem:[#allocation2 + $0x98] sm:$0xff] %vm212, 0.0
        %234 = vst.msk [vmem:[#allocation2 + $0xa0] sm:$0x3] %vm215, 0.0
        %235 = vst.msk [vmem:[#allocation2 + $0xa8] sm:$0xff] %vm212, 0.0
        %236 = vst.msk [vmem:[#allocation2 + $0xb0] sm:$0xff] %vm212, 0.0
        %237 = vst.msk [vmem:[#allocation2 + $0xb8] sm:$0x3] %vm215, 0.0
        %238 = vst.msk [vmem:[#allocation2 + $0xc0] sm:$0xff] %vm212, 0.0
        %239 = vst.msk [vmem:[#allocation2 + $0xc8] sm:$0xff] %vm212, 0.0
        %240 = vst.msk [vmem:[#allocation2 + $0xd0] sm:$0x3] %vm215, 0.0
        %241 = vst.msk [vmem:[#allocation2 + $0xd8] sm:$0xff] %vm212, 0.0
        %242 = vst.msk [vmem:[#allocation2 + $0xe0] sm:$0xff] %vm212, 0.0
        %243 = vst.msk [vmem:[#allocation2 + $0xe8] sm:$0x3] %vm215, 0.0
        %s244 = smul.u32 %s211, 16
        %s245 = scalar_lea.vmem %s210, %s244
        %v246 = vld [vmem:[%s245] sm:$0xff]
        %v247 = vld [vmem:[%s245 + $0x8] sm:$0xff]
        %v248 = vld [vmem:[%s245 + $0x10] sm:$0xff]
        %v249 = vld [vmem:[%s245 + $0x18] sm:$0xff]
        %v250 = vld [vmem:[%s245 + $0x20] sm:$0xff]
        %v251 = vld [vmem:[%s245 + $0x28] sm:$0xff]
        %v252 = vld [vmem:[%s245 + $0x30] sm:$0xff]
        %v253 = vld [vmem:[%s245 + $0x38] sm:$0xff]
        %v254 = vld [vmem:[%s245 + $0x40] sm:$0xff]
        %v255 = vld [vmem:[%s245 + $0x48] sm:$0xff]
        %v256 = vld [vmem:[%s245 + $0x50] sm:$0xff]
        %v257 = vld [vmem:[%s245 + $0x58] sm:$0xff]
        %v258 = vld [vmem:[%s245 + $0x60] sm:$0xff]
        %v259 = vld [vmem:[%s245 + $0x68] sm:$0xff]
        %v260 = vld [vmem:[%s245 + $0x70] sm:$0xff]
        %v261 = vld [vmem:[%s245 + $0x78] sm:$0xff]
        %s262 = scalar_lea.vmem [#allocation2], 24
        %263 = vst.msk [vmem:[%s262 + $0x1] sm:$0xff] %vm212, %v246
        %264 = vst.msk [vmem:[%s262 + $0x9] sm:$0xff] %vm212, %v247
        %265 = vst.msk [vmem:[%s262 + $0x19] sm:$0xff] %vm212, %v248
        %266 = vst.msk [vmem:[%s262 + $0x21] sm:$0xff] %vm212, %v249
        %267 = vst.msk [vmem:[%s262 + $0x31] sm:$0xff] %vm212, %v250
        %268 = vst.msk [vmem:[%s262 + $0x39] sm:$0xff] %vm212, %v251
        %269 = vst.msk [vmem:[%s262 + $0x49] sm:$0xff] %vm212, %v252
        %270 = vst.msk [vmem:[%s262 + $0x51] sm:$0xff] %vm212, %v253
        %271 = vst.msk [vmem:[%s262 + $0x61] sm:$0xff] %vm212, %v254
        %272 = vst.msk [vmem:[%s262 + $0x69] sm:$0xff] %vm212, %v255
        %273 = vst.msk [vmem:[%s262 + $0x79] sm:$0xff] %vm212, %v256
        %274 = vst.msk [vmem:[%s262 + $0x81] sm:$0xff] %vm212, %v257
        %275 = vst.msk [vmem:[%s262 + $0x91] sm:$0xff] %vm212, %v258
        %276 = vst.msk [vmem:[%s262 + $0x99] sm:$0xff] %vm212, %v259
        %277 = vst.msk [vmem:[%s262 + $0xa9] sm:$0xff] %vm212, %v260
        %278 = vst.msk [vmem:[%s262 + $0xb1] sm:$0xff] %vm212, %v261
        %p279 = scmp.gt.s32.totalorder %s24, 0
        // Predicated region
        $region37: #{tpu_custom_call.1} parent=35 // pred_check
          %p280 = pneg %p279
        $region38: #{tpu_custom_call.1} parent=35 // pred_check_branch
          %282 = sbr.rel (%p280) target = $region40
        $region39: #{tpu_custom_call.1} parent=35 // pred_region
          %s283 = ssub.s32 %s211, 1
          %s284 = smul.u32 %s283, 16
          %s285 = scalar_lea.vmem %s210, %s284
          %v286 = vld [vmem:[%s285] sm:$0xff]
          %v287 = vld [vmem:[%s285 + $0x8] sm:$0xff]
          %288 = vst.msk [vmem:[#allocation2 + $0x1] sm:$0xff] %vm212, %v286
          %289 = vst.msk [vmem:[#allocation2 + $0x9] sm:$0xff] %vm212, %v287
        $region40: #{tpu_custom_call.1} parent=35 // pred_fallthru
          _
        %p290 = scmp.lt.s32.totalorder %s24, 1
        // Predicated region
        $region41: #{tpu_custom_call.1} parent=35 // pred_check
          %p291 = pneg %p290
        $region42: #{tpu_custom_call.1} parent=35 // pred_check_branch
          %293 = sbr.rel (%p291) target = $region44
        $region43: #{tpu_custom_call.1} parent=35 // pred_region
          %s294 = sadd.s32 %s211, 8
          %s295 = smul.u32 %s294, 16
          %s296 = scalar_lea.vmem %s210, %s295
          %v297 = vld [vmem:[%s296] sm:$0xff]
          %v298 = vld [vmem:[%s296 + $0x8] sm:$0xff]
          %s299 = scalar_lea.vmem [#allocation2], 216
          %300 = vst.msk [vmem:[%s299 + $0x1] sm:$0xff] %vm212, %v297
          %301 = vst.msk [vmem:[%s299 + $0x9] sm:$0xff] %vm212, %v298
        $region44: #{tpu_custom_call.1} parent=35 // pred_fallthru
          _
        %v302 = vld [vmem:[#allocation2] sm:$0xff]
        %v303 = vld [vmem:[#allocation2 + $0x8] sm:$0xff]
        %v304 = vld [vmem:[#allocation2 + $0x18] sm:$0xff]
        %v305 = vld [vmem:[#allocation2 + $0x20] sm:$0xff]
        %v306 = vld [vmem:[#allocation2 + $0x30] sm:$0xff]
        %v307 = vld [vmem:[#allocation2 + $0x38] sm:$0xff]
        %v308 = vld [vmem:[#allocation2 + $0x48] sm:$0xff]
        %v309 = vld [vmem:[#allocation2 + $0x50] sm:$0xff]
        %v310 = vld [vmem:[#allocation2 + $0x60] sm:$0xff]
        %v311 = vld [vmem:[#allocation2 + $0x68] sm:$0xff]
        %v312 = vld [vmem:[#allocation2 + $0x78] sm:$0xff]
        %v313 = vld [vmem:[#allocation2 + $0x80] sm:$0xff]
        %v314 = vld [vmem:[#allocation2 + $0x90] sm:$0xff]
        %v315 = vld [vmem:[#allocation2 + $0x98] sm:$0xff]
        %v316 = vld [vmem:[#allocation2 + $0xa8] sm:$0xff]
        %v317 = vld [vmem:[#allocation2 + $0xb0] sm:$0xff]
        %v318 = vld [vmem:[#allocation2 + $0x1] sm:$0xff]
        %v319 = vld [vmem:[#allocation2 + $0x9] sm:$0xff]
        %v320 = vld [vmem:[#allocation2 + $0x19] sm:$0xff]
        %v321 = vld [vmem:[#allocation2 + $0x21] sm:$0xff]
        %v322 = vld [vmem:[#allocation2 + $0x31] sm:$0xff]
        %v323 = vld [vmem:[#allocation2 + $0x39] sm:$0xff]
        %v324 = vld [vmem:[#allocation2 + $0x49] sm:$0xff]
        %v325 = vld [vmem:[#allocation2 + $0x51] sm:$0xff]
        %v326 = vld [vmem:[#allocation2 + $0x61] sm:$0xff]
        %v327 = vld [vmem:[#allocation2 + $0x69] sm:$0xff]
        %v328 = vld [vmem:[#allocation2 + $0x79] sm:$0xff]
        %v329 = vld [vmem:[#allocation2 + $0x81] sm:$0xff]
        %v330 = vld [vmem:[#allocation2 + $0x91] sm:$0xff]
        %v331 = vld [vmem:[#allocation2 + $0x99] sm:$0xff]
        %v332 = vld [vmem:[#allocation2 + $0xa9] sm:$0xff]
        %v333 = vld [vmem:[#allocation2 + $0xb1] sm:$0xff]
        %v334 = vld [vmem:[#allocation2 + $0x2] sm:$0xff]
        %v335 = vld [vmem:[#allocation2 + $0xa] sm:$0xff]
        %v336 = vld [vmem:[#allocation2 + $0x1a] sm:$0xff]
        %v337 = vld [vmem:[#allocation2 + $0x22] sm:$0xff]
        %v338 = vld [vmem:[#allocation2 + $0x32] sm:$0xff]
        %v339 = vld [vmem:[#allocation2 + $0x3a] sm:$0xff]
        %v340 = vld [vmem:[#allocation2 + $0x4a] sm:$0xff]
        %v341 = vld [vmem:[#allocation2 + $0x52] sm:$0xff]
        %v342 = vld [vmem:[#allocation2 + $0x62] sm:$0xff]
        %v343 = vld [vmem:[#allocation2 + $0x6a] sm:$0xff]
        %v344 = vld [vmem:[#allocation2 + $0x7a] sm:$0xff]
        %v345 = vld [vmem:[#allocation2 + $0x82] sm:$0xff]
        %v346 = vld [vmem:[#allocation2 + $0x92] sm:$0xff]
        %v347 = vld [vmem:[#allocation2 + $0x9a] sm:$0xff]
        %v348 = vld [vmem:[#allocation2 + $0xaa] sm:$0xff]
        %v349 = vld [vmem:[#allocation2 + $0xb2] sm:$0xff]
        %v350 = vld [vmem:[%s262] sm:$0xff]
        %v351 = vld [vmem:[%s262 + $0x8] sm:$0xff]
        %v352 = vld [vmem:[%s262 + $0x18] sm:$0xff]
        %v353 = vld [vmem:[%s262 + $0x20] sm:$0xff]
        %v354 = vld [vmem:[%s262 + $0x30] sm:$0xff]
        %v355 = vld [vmem:[%s262 + $0x38] sm:$0xff]
        %v356 = vld [vmem:[%s262 + $0x48] sm:$0xff]
        %v357 = vld [vmem:[%s262 + $0x50] sm:$0xff]
        %v358 = vld [vmem:[%s262 + $0x60] sm:$0xff]
        %v359 = vld [vmem:[%s262 + $0x68] sm:$0xff]
        %v360 = vld [vmem:[%s262 + $0x78] sm:$0xff]
        %v361 = vld [vmem:[%s262 + $0x80] sm:$0xff]
        %v362 = vld [vmem:[%s262 + $0x90] sm:$0xff]
        %v363 = vld [vmem:[%s262 + $0x98] sm:$0xff]
        %v364 = vld [vmem:[%s262 + $0xa8] sm:$0xff]
        %v365 = vld [vmem:[%s262 + $0xb0] sm:$0xff]
        %v366 = vld [vmem:[%s262 + $0x1] sm:$0xff]
        %v367 = vld [vmem:[%s262 + $0x9] sm:$0xff]
        %v368 = vld [vmem:[%s262 + $0x19] sm:$0xff]
        %v369 = vld [vmem:[%s262 + $0x21] sm:$0xff]
        %v370 = vld [vmem:[%s262 + $0x31] sm:$0xff]
        %v371 = vld [vmem:[%s262 + $0x39] sm:$0xff]
        %v372 = vld [vmem:[%s262 + $0x49] sm:$0xff]
        %v373 = vld [vmem:[%s262 + $0x51] sm:$0xff]
        %v374 = vld [vmem:[%s262 + $0x61] sm:$0xff]
        %v375 = vld [vmem:[%s262 + $0x69] sm:$0xff]
        %v376 = vld [vmem:[%s262 + $0x79] sm:$0xff]
        %v377 = vld [vmem:[%s262 + $0x81] sm:$0xff]
        %v378 = vld [vmem:[%s262 + $0x91] sm:$0xff]
        %v379 = vld [vmem:[%s262 + $0x99] sm:$0xff]
        %v380 = vld [vmem:[%s262 + $0xa9] sm:$0xff]
        %v381 = vld [vmem:[%s262 + $0xb1] sm:$0xff]
        %v382 = vld [vmem:[%s262 + $0x2] sm:$0xff]
        %v383 = vld [vmem:[%s262 + $0xa] sm:$0xff]
        %v384 = vld [vmem:[%s262 + $0x1a] sm:$0xff]
        %v385 = vld [vmem:[%s262 + $0x22] sm:$0xff]
        %v386 = vld [vmem:[%s262 + $0x32] sm:$0xff]
        %v387 = vld [vmem:[%s262 + $0x3a] sm:$0xff]
        %v388 = vld [vmem:[%s262 + $0x4a] sm:$0xff]
        %v389 = vld [vmem:[%s262 + $0x52] sm:$0xff]
        %v390 = vld [vmem:[%s262 + $0x62] sm:$0xff]
        %v391 = vld [vmem:[%s262 + $0x6a] sm:$0xff]
        %v392 = vld [vmem:[%s262 + $0x7a] sm:$0xff]
        %v393 = vld [vmem:[%s262 + $0x82] sm:$0xff]
        %v394 = vld [vmem:[%s262 + $0x92] sm:$0xff]
        %v395 = vld [vmem:[%s262 + $0x9a] sm:$0xff]
        %v396 = vld [vmem:[%s262 + $0xaa] sm:$0xff]
        %v397 = vld [vmem:[%s262 + $0xb2] sm:$0xff]
        %s398 = scalar_lea.vmem [#allocation2], 48
        %v399 = vld [vmem:[%s398] sm:$0xff]
        %v400 = vld [vmem:[%s398 + $0x8] sm:$0xff]
        %v401 = vld [vmem:[%s398 + $0x18] sm:$0xff]
        %v402 = vld [vmem:[%s398 + $0x20] sm:$0xff]
        %v403 = vld [vmem:[%s398 + $0x30] sm:$0xff]
        %v404 = vld [vmem:[%s398 + $0x38] sm:$0xff]
        %v405 = vld [vmem:[%s398 + $0x48] sm:$0xff]
        %v406 = vld [vmem:[%s398 + $0x50] sm:$0xff]
        %v407 = vld [vmem:[%s398 + $0x60] sm:$0xff]
        %v408 = vld [vmem:[%s398 + $0x68] sm:$0xff]
        %v409 = vld [vmem:[%s398 + $0x78] sm:$0xff]
        %v410 = vld [vmem:[%s398 + $0x80] sm:$0xff]
        %v411 = vld [vmem:[%s398 + $0x90] sm:$0xff]
        %v412 = vld [vmem:[%s398 + $0x98] sm:$0xff]
        %v413 = vld [vmem:[%s398 + $0xa8] sm:$0xff]
        %v414 = vld [vmem:[%s398 + $0xb0] sm:$0xff]
        %v415 = vld [vmem:[%s398 + $0x1] sm:$0xff]
        %v416 = vld [vmem:[%s398 + $0x9] sm:$0xff]
        %v417 = vld [vmem:[%s398 + $0x19] sm:$0xff]
        %v418 = vld [vmem:[%s398 + $0x21] sm:$0xff]
        %v419 = vld [vmem:[%s398 + $0x31] sm:$0xff]
        %v420 = vld [vmem:[%s398 + $0x39] sm:$0xff]
        %v421 = vld [vmem:[%s398 + $0x49] sm:$0xff]
        %v422 = vld [vmem:[%s398 + $0x51] sm:$0xff]
        %v423 = vld [vmem:[%s398 + $0x61] sm:$0xff]
        %v424 = vld [vmem:[%s398 + $0x69] sm:$0xff]
        %v425 = vld [vmem:[%s398 + $0x79] sm:$0xff]
        %v426 = vld [vmem:[%s398 + $0x81] sm:$0xff]
        %v427 = vld [vmem:[%s398 + $0x91] sm:$0xff]
        %v428 = vld [vmem:[%s398 + $0x99] sm:$0xff]
        %v429 = vld [vmem:[%s398 + $0xa9] sm:$0xff]
        %v430 = vld [vmem:[%s398 + $0xb1] sm:$0xff]
        %v431 = vld [vmem:[%s398 + $0x2] sm:$0xff]
        %v432 = vld [vmem:[%s398 + $0xa] sm:$0xff]
        %v433 = vld [vmem:[%s398 + $0x1a] sm:$0xff]
        %v434 = vld [vmem:[%s398 + $0x22] sm:$0xff]
        %v435 = vld [vmem:[%s398 + $0x32] sm:$0xff]
        %v436 = vld [vmem:[%s398 + $0x3a] sm:$0xff]
        %v437 = vld [vmem:[%s398 + $0x4a] sm:$0xff]
        %v438 = vld [vmem:[%s398 + $0x52] sm:$0xff]
        %v439 = vld [vmem:[%s398 + $0x62] sm:$0xff]
        %v440 = vld [vmem:[%s398 + $0x6a] sm:$0xff]
        %v441 = vld [vmem:[%s398 + $0x7a] sm:$0xff]
        %v442 = vld [vmem:[%s398 + $0x82] sm:$0xff]
        %v443 = vld [vmem:[%s398 + $0x92] sm:$0xff]
        %v444 = vld [vmem:[%s398 + $0x9a] sm:$0xff]
        %v445 = vld [vmem:[%s398 + $0xaa] sm:$0xff]
        %v446 = vld [vmem:[%s398 + $0xb2] sm:$0xff]
        %463 = vrot.lane.b32.xlu0 %v318, 4
        %v464 = vpop.permute.xlu0 %463
        %465 = vrot.lane.b32.xlu0 %v319, 4
        %v466 = vpop.permute.xlu0 %465
        %467 = vrot.lane.b32.xlu0 %v320, 4
        %v468 = vpop.permute.xlu0 %467
        %469 = vrot.lane.b32.xlu0 %v321, 4
        %v470 = vpop.permute.xlu0 %469
        %471 = vrot.lane.b32.xlu0 %v322, 4
        %v472 = vpop.permute.xlu0 %471
        %473 = vrot.lane.b32.xlu0 %v323, 4
        %v474 = vpop.permute.xlu0 %473
        %475 = vrot.lane.b32.xlu0 %v324, 4
        %v476 = vpop.permute.xlu0 %475
        %477 = vrot.lane.b32.xlu0 %v325, 4
        %v478 = vpop.permute.xlu0 %477
        %479 = vrot.lane.b32.xlu0 %v326, 4
        %v480 = vpop.permute.xlu0 %479
        %481 = vrot.lane.b32.xlu0 %v327, 4
        %v482 = vpop.permute.xlu0 %481
        %483 = vrot.lane.b32.xlu0 %v328, 4
        %v484 = vpop.permute.xlu0 %483
        %485 = vrot.lane.b32.xlu0 %v329, 4
        %v486 = vpop.permute.xlu0 %485
        %487 = vrot.lane.b32.xlu0 %v330, 4
        %v488 = vpop.permute.xlu0 %487
        %489 = vrot.lane.b32.xlu0 %v331, 4
        %v490 = vpop.permute.xlu0 %489
        %491 = vrot.lane.b32.xlu0 %v332, 4
        %v492 = vpop.permute.xlu0 %491
        %493 = vrot.lane.b32.xlu0 %v333, 4
        %v494 = vpop.permute.xlu0 %493
        %527 = vrot.lane.b32.xlu0 %v334, 8
        %v528 = vpop.permute.xlu0 %527
        %529 = vrot.lane.b32.xlu0 %v335, 8
        %v530 = vpop.permute.xlu0 %529
        %531 = vrot.lane.b32.xlu0 %v336, 8
        %v532 = vpop.permute.xlu0 %531
        %533 = vrot.lane.b32.xlu0 %v337, 8
        %v534 = vpop.permute.xlu0 %533
        %535 = vrot.lane.b32.xlu0 %v338, 8
        %v536 = vpop.permute.xlu0 %535
        %537 = vrot.lane.b32.xlu0 %v339, 8
        %v538 = vpop.permute.xlu0 %537
        %539 = vrot.lane.b32.xlu0 %v340, 8
        %v540 = vpop.permute.xlu0 %539
        %541 = vrot.lane.b32.xlu0 %v341, 8
        %v542 = vpop.permute.xlu0 %541
        %543 = vrot.lane.b32.xlu0 %v342, 8
        %v544 = vpop.permute.xlu0 %543
        %545 = vrot.lane.b32.xlu0 %v343, 8
        %v546 = vpop.permute.xlu0 %545
        %547 = vrot.lane.b32.xlu0 %v344, 8
        %v548 = vpop.permute.xlu0 %547
        %549 = vrot.lane.b32.xlu0 %v345, 8
        %v550 = vpop.permute.xlu0 %549
        %551 = vrot.lane.b32.xlu0 %v346, 8
        %v552 = vpop.permute.xlu0 %551
        %553 = vrot.lane.b32.xlu0 %v347, 8
        %v554 = vpop.permute.xlu0 %553
        %555 = vrot.lane.b32.xlu0 %v348, 8
        %v556 = vpop.permute.xlu0 %555
        %557 = vrot.lane.b32.xlu0 %v349, 8
        %v558 = vpop.permute.xlu0 %557
        %591 = vrot.lane.b32.xlu0 %v350, 12
        %v592 = vpop.permute.xlu0 %591
        %593 = vrot.lane.b32.xlu0 %v351, 12
        %v594 = vpop.permute.xlu0 %593
        %595 = vrot.lane.b32.xlu0 %v352, 12
        %v596 = vpop.permute.xlu0 %595
        %597 = vrot.lane.b32.xlu0 %v353, 12
        %v598 = vpop.permute.xlu0 %597
        %599 = vrot.lane.b32.xlu0 %v354, 12
        %v600 = vpop.permute.xlu0 %599
        %601 = vrot.lane.b32.xlu0 %v355, 12
        %v602 = vpop.permute.xlu0 %601
        %603 = vrot.lane.b32.xlu0 %v356, 12
        %v604 = vpop.permute.xlu0 %603
        %605 = vrot.lane.b32.xlu0 %v357, 12
        %v606 = vpop.permute.xlu0 %605
        %607 = vrot.lane.b32.xlu0 %v358, 12
        %v608 = vpop.permute.xlu0 %607
        %609 = vrot.lane.b32.xlu0 %v359, 12
        %v610 = vpop.permute.xlu0 %609
        %611 = vrot.lane.b32.xlu0 %v360, 12
        %v612 = vpop.permute.xlu0 %611
        %613 = vrot.lane.b32.xlu0 %v361, 12
        %v614 = vpop.permute.xlu0 %613
        %615 = vrot.lane.b32.xlu0 %v362, 12
        %v616 = vpop.permute.xlu0 %615
        %617 = vrot.lane.b32.xlu0 %v363, 12
        %v618 = vpop.permute.xlu0 %617
        %619 = vrot.lane.b32.xlu0 %v364, 12
        %v620 = vpop.permute.xlu0 %619
        %621 = vrot.lane.b32.xlu0 %v365, 12
        %v622 = vpop.permute.xlu0 %621
        %655 = vrot.lane.b32.xlu0 %v366, 16
        %v656 = vpop.permute.xlu0 %655
        %657 = vrot.lane.b32.xlu0 %v367, 16
        %v658 = vpop.permute.xlu0 %657
        %659 = vrot.lane.b32.xlu0 %v368, 16
        %v660 = vpop.permute.xlu0 %659
        %661 = vrot.lane.b32.xlu0 %v369, 16
        %v662 = vpop.permute.xlu0 %661
        %663 = vrot.lane.b32.xlu0 %v370, 16
        %v664 = vpop.permute.xlu0 %663
        %665 = vrot.lane.b32.xlu0 %v371, 16
        %v666 = vpop.permute.xlu0 %665
        %667 = vrot.lane.b32.xlu0 %v372, 16
        %v668 = vpop.permute.xlu0 %667
        %669 = vrot.lane.b32.xlu0 %v373, 16
        %v670 = vpop.permute.xlu0 %669
        %671 = vrot.lane.b32.xlu0 %v374, 16
        %v672 = vpop.permute.xlu0 %671
        %673 = vrot.lane.b32.xlu0 %v375, 16
        %v674 = vpop.permute.xlu0 %673
        %675 = vrot.lane.b32.xlu0 %v376, 16
        %v676 = vpop.permute.xlu0 %675
        %677 = vrot.lane.b32.xlu0 %v377, 16
        %v678 = vpop.permute.xlu0 %677
        %679 = vrot.lane.b32.xlu0 %v378, 16
        %v680 = vpop.permute.xlu0 %679
        %681 = vrot.lane.b32.xlu0 %v379, 16
        %v682 = vpop.permute.xlu0 %681
        %683 = vrot.lane.b32.xlu0 %v380, 16
        %v684 = vpop.permute.xlu0 %683
        %685 = vrot.lane.b32.xlu0 %v381, 16
        %v686 = vpop.permute.xlu0 %685
        %719 = vrot.lane.b32.xlu0 %v382, 20
        %v720 = vpop.permute.xlu0 %719
        %721 = vrot.lane.b32.xlu0 %v383, 20
        %v722 = vpop.permute.xlu0 %721
        %723 = vrot.lane.b32.xlu0 %v384, 20
        %v724 = vpop.permute.xlu0 %723
        %725 = vrot.lane.b32.xlu0 %v385, 20
        %v726 = vpop.permute.xlu0 %725
        %727 = vrot.lane.b32.xlu0 %v386, 20
        %v728 = vpop.permute.xlu0 %727
        %729 = vrot.lane.b32.xlu0 %v387, 20
        %v730 = vpop.permute.xlu0 %729
        %731 = vrot.lane.b32.xlu0 %v388, 20
        %v732 = vpop.permute.xlu0 %731
        %733 = vrot.lane.b32.xlu0 %v389, 20
        %v734 = vpop.permute.xlu0 %733
        %735 = vrot.lane.b32.xlu0 %v390, 20
        %v736 = vpop.permute.xlu0 %735
        %737 = vrot.lane.b32.xlu0 %v391, 20
        %v738 = vpop.permute.xlu0 %737
        %739 = vrot.lane.b32.xlu0 %v392, 20
        %v740 = vpop.permute.xlu0 %739
        %741 = vrot.lane.b32.xlu0 %v393, 20
        %v742 = vpop.permute.xlu0 %741
        %743 = vrot.lane.b32.xlu0 %v394, 20
        %v744 = vpop.permute.xlu0 %743
        %745 = vrot.lane.b32.xlu0 %v395, 20
        %v746 = vpop.permute.xlu0 %745
        %747 = vrot.lane.b32.xlu0 %v396, 20
        %v748 = vpop.permute.xlu0 %747
        %749 = vrot.lane.b32.xlu0 %v397, 20
        %v750 = vpop.permute.xlu0 %749
        %783 = vrot.lane.b32.xlu0 %v399, 24
        %v784 = vpop.permute.xlu0 %783
        %785 = vrot.lane.b32.xlu0 %v400, 24
        %v786 = vpop.permute.xlu0 %785
        %787 = vrot.lane.b32.xlu0 %v401, 24
        %v788 = vpop.permute.xlu0 %787
        %789 = vrot.lane.b32.xlu0 %v402, 24
        %v790 = vpop.permute.xlu0 %789
        %791 = vrot.lane.b32.xlu0 %v403, 24
        %v792 = vpop.permute.xlu0 %791
        %793 = vrot.lane.b32.xlu0 %v404, 24
        %v794 = vpop.permute.xlu0 %793
        %795 = vrot.lane.b32.xlu0 %v405, 24
        %v796 = vpop.permute.xlu0 %795
        %797 = vrot.lane.b32.xlu0 %v406, 24
        %v798 = vpop.permute.xlu0 %797
        %799 = vrot.lane.b32.xlu0 %v407, 24
        %v800 = vpop.permute.xlu0 %799
        %801 = vrot.lane.b32.xlu0 %v408, 24
        %v802 = vpop.permute.xlu0 %801
        %803 = vrot.lane.b32.xlu0 %v409, 24
        %v804 = vpop.permute.xlu0 %803
        %805 = vrot.lane.b32.xlu0 %v410, 24
        %v806 = vpop.permute.xlu0 %805
        %807 = vrot.lane.b32.xlu0 %v411, 24
        %v808 = vpop.permute.xlu0 %807
        %809 = vrot.lane.b32.xlu0 %v412, 24
        %v810 = vpop.permute.xlu0 %809
        %811 = vrot.lane.b32.xlu0 %v413, 24
        %v812 = vpop.permute.xlu0 %811
        %813 = vrot.lane.b32.xlu0 %v414, 24
        %v814 = vpop.permute.xlu0 %813
        %847 = vrot.lane.b32.xlu0 %v415, 28
        %v848 = vpop.permute.xlu0 %847
        %849 = vrot.lane.b32.xlu0 %v416, 28
        %v850 = vpop.permute.xlu0 %849
        %851 = vrot.lane.b32.xlu0 %v417, 28
        %v852 = vpop.permute.xlu0 %851
        %853 = vrot.lane.b32.xlu0 %v418, 28
        %v854 = vpop.permute.xlu0 %853
        %855 = vrot.lane.b32.xlu0 %v419, 28
        %v856 = vpop.permute.xlu0 %855
        %857 = vrot.lane.b32.xlu0 %v420, 28
        %v858 = vpop.permute.xlu0 %857
        %859 = vrot.lane.b32.xlu0 %v421, 28
        %v860 = vpop.permute.xlu0 %859
        %861 = vrot.lane.b32.xlu0 %v422, 28
        %v862 = vpop.permute.xlu0 %861
        %863 = vrot.lane.b32.xlu0 %v423, 28
        %v864 = vpop.permute.xlu0 %863
        %865 = vrot.lane.b32.xlu0 %v424, 28
        %v866 = vpop.permute.xlu0 %865
        %867 = vrot.lane.b32.xlu0 %v425, 28
        %v868 = vpop.permute.xlu0 %867
        %869 = vrot.lane.b32.xlu0 %v426, 28
        %v870 = vpop.permute.xlu0 %869
        %871 = vrot.lane.b32.xlu0 %v427, 28
        %v872 = vpop.permute.xlu0 %871
        %873 = vrot.lane.b32.xlu0 %v428, 28
        %v874 = vpop.permute.xlu0 %873
        %875 = vrot.lane.b32.xlu0 %v429, 28
        %v876 = vpop.permute.xlu0 %875
        %877 = vrot.lane.b32.xlu0 %v430, 28
        %v878 = vpop.permute.xlu0 %877
        %911 = vrot.lane.b32.xlu0 %v431, 32
        %v912 = vpop.permute.xlu0 %911
        %913 = vrot.lane.b32.xlu0 %v432, 32
        %v914 = vpop.permute.xlu0 %913
        %915 = vrot.lane.b32.xlu0 %v433, 32
        %v916 = vpop.permute.xlu0 %915
        %917 = vrot.lane.b32.xlu0 %v434, 32
        %v918 = vpop.permute.xlu0 %917
        %919 = vrot.lane.b32.xlu0 %v435, 32
        %v920 = vpop.permute.xlu0 %919
        %921 = vrot.lane.b32.xlu0 %v436, 32
        %v922 = vpop.permute.xlu0 %921
        %923 = vrot.lane.b32.xlu0 %v437, 32
        %v924 = vpop.permute.xlu0 %923
        %925 = vrot.lane.b32.xlu0 %v438, 32
        %v926 = vpop.permute.xlu0 %925
        %927 = vrot.lane.b32.xlu0 %v439, 32
        %v928 = vpop.permute.xlu0 %927
        %929 = vrot.lane.b32.xlu0 %v440, 32
        %v930 = vpop.permute.xlu0 %929
        %931 = vrot.lane.b32.xlu0 %v441, 32
        %v932 = vpop.permute.xlu0 %931
        %933 = vrot.lane.b32.xlu0 %v442, 32
        %v934 = vpop.permute.xlu0 %933
        %935 = vrot.lane.b32.xlu0 %v443, 32
        %v936 = vpop.permute.xlu0 %935
        %937 = vrot.lane.b32.xlu0 %v444, 32
        %v938 = vpop.permute.xlu0 %937
        %939 = vrot.lane.b32.xlu0 %v445, 32
        %v940 = vpop.permute.xlu0 %939
        %941 = vrot.lane.b32.xlu0 %v446, 32
        %v942 = vpop.permute.xlu0 %941
        %v959 = vsel %vm212, %v302, %v464
        %v960 = vsel %vm212, %v303, %v466
        %v961 = vsel %vm212, %v304, %v468
        %v962 = vsel %vm212, %v305, %v470
        %v963 = vsel %vm212, %v306, %v472
        %v964 = vsel %vm212, %v307, %v474
        %v965 = vsel %vm212, %v308, %v476
        %v966 = vsel %vm212, %v309, %v478
        %v967 = vsel %vm212, %v310, %v480
        %v968 = vsel %vm212, %v311, %v482
        %v969 = vsel %vm212, %v312, %v484
        %v970 = vsel %vm212, %v313, %v486
        %v971 = vsel %vm212, %v314, %v488
        %v972 = vsel %vm212, %v315, %v490
        %v973 = vsel %vm212, %v316, %v492
        %v974 = vsel %vm212, %v317, %v494
        %vm975 = vcmask 64512
        %v976 = vsel %vm975, %v959, %v528
        %v977 = vsel %vm975, %v960, %v530
        %v978 = vsel %vm975, %v961, %v532
        %v979 = vsel %vm975, %v962, %v534
        %v980 = vsel %vm975, %v963, %v536
        %v981 = vsel %vm975, %v964, %v538
        %v982 = vsel %vm975, %v965, %v540
        %v983 = vsel %vm975, %v966, %v542
        %v984 = vsel %vm975, %v967, %v544
        %v985 = vsel %vm975, %v968, %v546
        %v986 = vsel %vm975, %v969, %v548
        %v987 = vsel %vm975, %v970, %v550
        %v988 = vsel %vm975, %v971, %v552
        %v989 = vsel %vm975, %v972, %v554
        %v990 = vsel %vm975, %v973, %v556
        %v991 = vsel %vm975, %v974, %v558
        %vm992 = vcmask 97280
        %v993 = vsel %vm992, %v976, %v592
        %v994 = vsel %vm992, %v977, %v594
        %v995 = vsel %vm992, %v978, %v596
        %v996 = vsel %vm992, %v979, %v598
        %v997 = vsel %vm992, %v980, %v600
        %v998 = vsel %vm992, %v981, %v602
        %v999 = vsel %vm992, %v982, %v604
        %v1000 = vsel %vm992, %v983, %v606
        %v1001 = vsel %vm992, %v984, %v608
        %v1002 = vsel %vm992, %v985, %v610
        %v1003 = vsel %vm992, %v986, %v612
        %v1004 = vsel %vm992, %v987, %v614
        %v1005 = vsel %vm992, %v988, %v616
        %v1006 = vsel %vm992, %v989, %v618
        %v1007 = vsel %vm992, %v990, %v620
        %v1008 = vsel %vm992, %v991, %v622
        %vm1009 = vcmask 130048
        %v1010 = vsel %vm1009, %v993, %v656
        %v1011 = vsel %vm1009, %v994, %v658
        %v1012 = vsel %vm1009, %v995, %v660
        %v1013 = vsel %vm1009, %v996, %v662
        %v1014 = vsel %vm1009, %v997, %v664
        %v1015 = vsel %vm1009, %v998, %v666
        %v1016 = vsel %vm1009, %v999, %v668
        %v1017 = vsel %vm1009, %v1000, %v670
        %v1018 = vsel %vm1009, %v1001, %v672
        %v1019 = vsel %vm1009, %v1002, %v674
        %v1020 = vsel %vm1009, %v1003, %v676
        %v1021 = vsel %vm1009, %v1004, %v678
        %v1022 = vsel %vm1009, %v1005, %v680
        %v1023 = vsel %vm1009, %v1006, %v682
        %v1024 = vsel %vm1009, %v1007, %v684
        %v1025 = vsel %vm1009, %v1008, %v686
        %vm1026 = vcmask 162816
        %v1027 = vsel %vm1026, %v1010, %v720
        %v1028 = vsel %vm1026, %v1011, %v722
        %v1029 = vsel %vm1026, %v1012, %v724
        %v1030 = vsel %vm1026, %v1013, %v726
        %v1031 = vsel %vm1026, %v1014, %v728
        %v1032 = vsel %vm1026, %v1015, %v730
        %v1033 = vsel %vm1026, %v1016, %v732
        %v1034 = vsel %vm1026, %v1017, %v734
        %v1035 = vsel %vm1026, %v1018, %v736
        %v1036 = vsel %vm1026, %v1019, %v738
        %v1037 = vsel %vm1026, %v1020, %v740
        %v1038 = vsel %vm1026, %v1021, %v742
        %v1039 = vsel %vm1026, %v1022, %v744
        %v1040 = vsel %vm1026, %v1023, %v746
        %v1041 = vsel %vm1026, %v1024, %v748
        %v1042 = vsel %vm1026, %v1025, %v750
        %vm1043 = vcmask 195584
        %v1044 = vsel %vm1043, %v1027, %v784
        %v1045 = vsel %vm1043, %v1028, %v786
        %v1046 = vsel %vm1043, %v1029, %v788
        %v1047 = vsel %vm1043, %v1030, %v790
        %v1048 = vsel %vm1043, %v1031, %v792
        %v1049 = vsel %vm1043, %v1032, %v794
        %v1050 = vsel %vm1043, %v1033, %v796
        %v1051 = vsel %vm1043, %v1034, %v798
        %v1052 = vsel %vm1043, %v1035, %v800
        %v1053 = vsel %vm1043, %v1036, %v802
        %v1054 = vsel %vm1043, %v1037, %v804
        %v1055 = vsel %vm1043, %v1038, %v806
        %v1056 = vsel %vm1043, %v1039, %v808
        %v1057 = vsel %vm1043, %v1040, %v810
        %v1058 = vsel %vm1043, %v1041, %v812
        %v1059 = vsel %vm1043, %v1042, %v814
        %vm1060 = vcmask 228352
        %v1061 = vsel %vm1060, %v1044, %v848
        %v1062 = vsel %vm1060, %v1045, %v850
        %v1063 = vsel %vm1060, %v1046, %v852
        %v1064 = vsel %vm1060, %v1047, %v854
        %v1065 = vsel %vm1060, %v1048, %v856
        %v1066 = vsel %vm1060, %v1049, %v858
        %v1067 = vsel %vm1060, %v1050, %v860
        %v1068 = vsel %vm1060, %v1051, %v862
        %v1069 = vsel %vm1060, %v1052, %v864
        %v1070 = vsel %vm1060, %v1053, %v866
        %v1071 = vsel %vm1060, %v1054, %v868
        %v1072 = vsel %vm1060, %v1055, %v870
        %v1073 = vsel %vm1060, %v1056, %v872
        %v1074 = vsel %vm1060, %v1057, %v874
        %v1075 = vsel %vm1060, %v1058, %v876
        %v1076 = vsel %vm1060, %v1059, %v878
        %vm1077 = vcmask 261120
        %v1078 = vsel %vm1077, %v1061, %v912
        %v1079 = vsel %vm1077, %v1062, %v914
        %v1080 = vsel %vm1077, %v1063, %v916
        %v1081 = vsel %vm1077, %v1064, %v918
        %v1082 = vsel %vm1077, %v1065, %v920
        %v1083 = vsel %vm1077, %v1066, %v922
        %v1084 = vsel %vm1077, %v1067, %v924
        %v1085 = vsel %vm1077, %v1068, %v926
        %v1086 = vsel %vm1077, %v1069, %v928
        %v1087 = vsel %vm1077, %v1070, %v930
        %v1088 = vsel %vm1077, %v1071, %v932
        %v1089 = vsel %vm1077, %v1072, %v934
        %v1090 = vsel %vm1077, %v1073, %v936
        %v1091 = vsel %vm1077, %v1074, %v938
        %v1092 = vsel %vm1077, %v1075, %v940
        %v1093 = vsel %vm1077, %v1076, %v942
        %v1094 = vld [vmem:[%s1] sm:$0xff]
        %v1095 = vld [vmem:[%s1 + $0x8] sm:$0xff]
        %v1096 = vld [vmem:[%s2] sm:$0xff]
        %v1097 = vld [vmem:[%s2 + $0x8] sm:$0xff]
        %1099 = vset.pattern.permute.xlu0 0
        %1100 = vperm.xlu0 %1099, %v1096
        %v1101 = vpop.permute.xlu0 %1100
        %1104 = vset.pattern.permute.xlu0 0
        %1105 = vperm.xlu0 %1104, %v1097
        %v1106 = vpop.permute.xlu0 %1105
        %vm1108 = vcmask 293888
        %v1110 = vsel %vm1108, %v1094, 0
        %v1113 = vsel %vm1108, %v1095, 0
        %v1116 = vsel %vm1108, %v1078, 0
        %v1119 = vsel %vm1108, %v1079, 0
        %v1122 = vsel %vm1108, %v1080, 0
        %v1125 = vsel %vm1108, %v1081, 0
        %v1128 = vsel %vm1108, %v1082, 0
        %v1131 = vsel %vm1108, %v1083, 0
        %v1134 = vsel %vm1108, %v1084, 0
        %v1137 = vsel %vm1108, %v1085, 0
        %v1140 = vsel %vm1108, %v1086, 0
        %v1143 = vsel %vm1108, %v1087, 0
        %v1146 = vsel %vm1108, %v1088, 0
        %v1149 = vsel %vm1108, %v1089, 0
        %v1152 = vsel %vm1108, %v1090, 0
        %v1155 = vsel %vm1108, %v1091, 0
        %v1158 = vsel %vm1108, %v1092, 0
        %v1161 = vsel %vm1108, %v1093, 0
        %1163 = vmatprep.subr.mxu0 0.0
        %1164 = vmatpush1.xpose.msra.mxu0 %v1116
        %1165 = vmatprep.subr.mxu0 0.0
        %1166 = vmatpush1.xpose.msra.mxu0 %v1119
        %1167 = vmatprep.subr.mxu0 0.0
        %1168 = vmatpush1.xpose.msra.mxu0 %v1122
        %1169 = vmatprep.subr.mxu0 0.0
        %1170 = vmatpush1.xpose.msra.mxu0 %v1125
        %1171 = vmatprep.subr.mxu0 0.0
        %1172 = vmatpush1.xpose.msra.mxu0 %v1128
        %1173 = vmatprep.subr.mxu0 0.0
        %1174 = vmatpush1.xpose.msra.mxu0 %v1131
        %1175 = vmatprep.subr.mxu0 0.0
        %1176 = vmatpush1.xpose.msra.mxu0 %v1134
        %1177 = vmatprep.subr.mxu0 0.0
        %1178 = vmatpush1.xpose.msra.mxu0 %v1137
        %1179 = vmatprep.subr.mxu0 0.0
        %1180 = vmatpush1.xpose.msra.mxu0 %v1140
        %1181 = vmatprep.subr.mxu0 0.0
        %1182 = vmatpush1.xpose.msra.mxu0 %v1143
        %1183 = vmatprep.subr.mxu0 0.0
        %1184 = vmatpush1.xpose.msra.mxu0 %v1146
        %1185 = vmatprep.subr.mxu0 0.0
        %1186 = vmatpush1.xpose.msra.mxu0 %v1149
        %1187 = vmatprep.subr.mxu0 0.0
        %1188 = vmatpush1.xpose.msra.mxu0 %v1152
        %1189 = vmatprep.subr.mxu0 0.0
        %1190 = vmatpush1.xpose.msra.mxu0 %v1155
        %1191 = vmatprep.subr.mxu0 0.0
        %1192 = vmatpush1.xpose.msra.mxu0 %v1158
        %1193 = vmatprep.subr.mxu0 0.0
        %1194 = vmatpush1.xpose.msra.mxu0 %v1161
        %1195 = vmatprep.subr.mxu0 0.0
        %1196 = vmatpush1.xpose.msra.mxu0 0.0
        %1197 = vmatprep.subr.mxu0 0.0
        %1198 = vmatpush1.xpose.msra.mxu0 0.0
        %1199 = vmatprep.subr.mxu0 0.0
        %1200 = vmatpush1.xpose.msra.mxu0 0.0
        %1201 = vmatprep.subr.mxu0 0.0
        %1202 = vmatpush1.xpose.msra.mxu0 0.0
        %1203 = vmatprep.subr.mxu0 0.0
        %1204 = vmatpush1.xpose.msra.mxu0 0.0
        %1205 = vmatprep.subr.mxu0 0.0
        %1206 = vmatpush1.xpose.msra.mxu0 0.0
        %1207 = vmatprep.subr.mxu0 0.0
        %1208 = vmatpush1.xpose.msra.mxu0 0.0
        %1209 = vmatprep.subr.mxu0 0.0
        %1210 = vmatpush1.xpose.msra.mxu0 0.0
        %1211 = vmatprep.subr.mxu0 0.0
        %1212 = vmatpush1.xpose.msra.mxu0 0.0
        %1213 = vmatprep.subr.mxu0 0.0
        %1214 = vmatpush1.xpose.msra.mxu0 0.0
        %1215 = vmatprep.subr.mxu0 0.0
        %1216 = vmatpush1.xpose.msra.mxu0 0.0
        %1217 = vmatprep.subr.mxu0 0.0
        %1218 = vmatpush1.xpose.msra.mxu0 0.0
        %1219 = vmatprep.subr.mxu0 0.0
        %1220 = vmatpush1.xpose.msra.mxu0 0.0
        %1221 = vmatprep.subr.mxu0 0.0
        %1222 = vmatpush1.xpose.msra.mxu0 0.0
        %1223 = vmatprep.subr.mxu0 0.0
        %1224 = vmatpush1.xpose.msra.mxu0 0.0
        %1225 = vmatprep.subr.mxu0 0.0
        %1226 = vmatpush1.xpose.msra.mxu0 0.0
        %1227 = vmatprep.mubr.f32.mxu0 0.0
        %1228 = vmatmul.mubr.f32.gmra.mrb[0].mxu0 %v1110
        %v1229 = vpop.f32.mrb[0].mxu0
        %v1230 = vadd.f32 %v1101, %v1229
        %v1231 = vpop.f32.mrb[0].mxu0
        %1232 = vmatprep.mubr.f32.mxu0 0.0
        %1233 = vmatmul.mubr.f32.gmra.mrb[0].mxu0 %v1113
        %v1234 = vpop.f32.mrb[0].mxu0
        %v1235 = vadd.f32 %v1106, %v1234
        %v1236 = vpop.f32.mrb[0].mxu0
        %1237 = vdwg.mxu0
        %s1238 = sld [smem:[#allocation3]]
        %vm1239 = vcmp.ge.f32.partialorder %v1230, 0.0
        %vm1240 = vcmp.ge.f32.partialorder %v1235, 0.0
        %v1241 = vstv %s1238
        %v1242 = vmul.f32 %v1241, %v1230
        %v1243 = vmul.f32 %v1241, %v1235
        %v1244 = vsel %vm1239, %v1230, %v1242
        %v1245 = vsel %vm1240, %v1235, %v1243
        %1246 = vst [vmem:[%s205] sm:$0xff] %v1244
        %1247 = vst [vmem:[%s205 + $0x8] sm:$0xff] %v1245
        %s1248 = sand.u32 %s130, 1
        %s1249 = scalar_lea.sflag [#allocation5], %s1248
        %s1250 = sand.u32 %s130, 1
        %s1251 = smul.addr %s1250, 16
        %s1252 = scalar_lea.vmem [#allocation4], %s1251
        // Predicated region
        $region45: #{tpu_custom_call.1} parent=35 // pred_check
          %p1253 = pneg %p140
        $region46: #{tpu_custom_call.1} parent=35 // pred_check_branch
          %1255 = sbr.rel (%p1253) target = $region48
        $region47: #{tpu_custom_call.1} parent=35 // pred_region
          %s1257 = ssub.s32 256, 256
          %1258 = vsyncadd %s1249, %s1257
          %s1259 = smul.addr %s23, 4
          %s1260 = sadd.s32 %s24, %s1259
          %s1261 = smul.addr %s1260, 128
          %s1262 = scalar_lea.hbm %s4, %s1261
          %s1263 = sshll.u32 %s1252, 4
          %s1264 = int_to_ptr.vmem [resolvable:$true] %s1263
          %1269 = dma.vmem_to_hbm [thread:$0]  %s1264, 256, %s1262, %s1249, 128, 256, 8
        $region48: #{tpu_custom_call.1} parent=35 // pred_fallthru
          _
      $region36: #{tpu_custom_call.1} parent=5 // pred_fallthru
        _
      %p1270 = scmp.le.s32.totalorder 2, %s14
      // Predicated region
      $region49: #{tpu_custom_call.1} parent=5 // pred_check
        %p1271 = pneg %p1270
      $region50: #{tpu_custom_call.1} parent=5 // pred_check_branch
        %1273 = sbr.rel (%p1271) target = $region52
      $region51: #{tpu_custom_call.1} parent=5 // pred_region
        %s1274 = ssub.s32 %s14, 2
        // Predicated region
        $region53: #{tpu_custom_call.1} parent=51 // pred_check
          %p1275 = pneg %p146
        $region54: #{tpu_custom_call.1} parent=51 // pred_check_branch
          %1277 = sbr.rel (%p1275) target = $region56
        $region55: #{tpu_custom_call.1} parent=51 // pred_region
          %s1278 = sand.u32 %s131, 1
          %s1279 = scalar_lea.sflag [#allocation5], %s1278
          %s1280 = sand.u32 %s131, 1
          %s1281 = smul.addr %s1280, 16
          %s1282 = scalar_lea.vmem [#allocation4], %s1281
          %1283 = dma.done %s1279, 256
        $region56: #{tpu_custom_call.1} parent=51 // pred_fallthru
          _
      $region52: #{tpu_custom_call.1} parent=5 // pred_fallthru
        _
    $region6: #{tpu_custom_call.1} parent=1 // loop_footer
      %s18 = sadd.s32 1, %s14
    $region7: #{tpu_custom_call.1} parent=1 // loop_footer_branch
      %13 = sbr.rel target = $region3
    $region8: #{tpu_custom_call.1} parent=1 // loop_exit
      _
    %1284 = vsyncpa [#allocation5], 1
    %s1285 = scalar_lea.sflag [#allocation5], 1
    %1286 = vsyncpa %s1285, 1

</llo_original>
